<compile_context>
chip_gen: v5e
topology: v5e:2x2
jax: 0.10.0
libtpu: 0.0.40
codegen_flags: <defaults>
</compile_context>

<pallas_src>
import jax
import jax.numpy as jnp
from jax.experimental import pallas as pl
from jax.experimental.pallas import tpu as pltpu


_LANES = 128          # vreg lane width
_SMALL_N = 1 << 16    # below this, a fused XLA add beats Pallas launch overhead


def _add_one_kernel(x_ref, o_ref):
    # Elementwise: out = x + 1 (weakly-typed 1 keeps the input dtype).
    o_ref[...] = x_ref[...] + 1


def _round_up(x: int, m: int) -> int:
    return ((x + m - 1) // m) * m


def _round_down(x: int, m: int) -> int:
    return (x // m) * m


def _block_byte_budget() -> int:
    # ~2 MiB blocks are near the HBM-roofline plateau everywhere and keep the
    # double-buffered in+out footprint (4x block) inside v5e's 16 MiB scoped
    # VMEM default.  v6e/v7x (32 MiB scoped) get 4 MiB blocks to better
    # amortize the ~0.35 us per-grid-step overhead at higher HBM bandwidth.
    try:
        kind = jax.devices()[0].device_kind.lower()
    except Exception:
        kind = ""
    if "v5" in kind:
        return 2 * 1024 * 1024
    return 4 * 1024 * 1024


def loan_amort_forward(tensor: jax.Array, *, force_pallas: bool = False) -> jax.Array:
    """Pallas equivalent of LoanAmort.forward(): returns tensor + 1."""
    orig_shape = tensor.shape
    dtype = tensor.dtype
    n = tensor.size

    # Fast path: tiny inputs (including the module's default (3,3,3)) are pure
    # launch overhead for a custom call; a fused XLA add is essentially free.
    if n == 0 or (n < _SMALL_N and not force_pallas):
        return tensor + 1

    itemsize = jnp.dtype(dtype).itemsize
    sublane = 8 * max(1, 4 // itemsize)   # 8 (f32) / 16 (bf16) / 32 (int8)

    rows = pl.cdiv(n, _LANES)
    padded_n = rows * _LANES

    flat = tensor.reshape(-1)
    needs_pad = padded_n != n
    if needs_pad:
        # At most 127 pad elements; only hit when n % 128 != 0.
        # TODO(synk): a fully copy-free path for non-128-aligned n would need a
        # 1-D / manual-DMA formulation; not worth it for an elementwise add.
        flat = jnp.pad(flat, (0, padded_n - n))
    x2d = flat.reshape(rows, _LANES)

    # Block sizing: hold a constant byte budget per block across dtypes, keep
    # the sublane dim tile-aligned, and split into >= 2 blocks when possible so
    # both v7x TensorCores stream in parallel.
    cap_rows = max(
        sublane,
        _round_down(_block_byte_budget() // (_LANES * itemsize), sublane),
    )
    if rows <= 2 * sublane:
        # Too small to split into aligned halves: one full-extent block
        # (block == full array shape, so the (8,128) rule is waived).
        block_rows = rows
    else:
        per_half = _round_up(pl.cdiv(rows, 2), sublane)
        block_rows = min(cap_rows, per_half)

    grid = (pl.cdiv(rows, block_rows),)
    out2d = pl.pallas_call(
        _add_one_kernel,
        out_shape=jax.ShapeDtypeStruct((rows, _LANES), dtype),
        grid=grid,
        in_specs=[pl.BlockSpec((block_rows, _LANES), lambda i: (i, 0))],
        out_specs=pl.BlockSpec((block_rows, _LANES), lambda i: (i, 0)),
        compiler_params=pltpu.CompilerParams(
            dimension_semantics=("parallel",)),
    )(x2d)

    out_flat = out2d.reshape(-1)
    if needs_pad:
        out_flat = out_flat[:n]
    return out_flat.reshape(orig_shape)


class LoanAmortPallas:
    """Mirror of the PyTorch LoanAmort module using JAX + Pallas."""

    def __init__(self, shape=(3, 3, 3), key=None):
        if key is None:
            key = jax.random.PRNGKey(0)
        # Deterministic stand-in for torch.randn(shape).
        self.tensor = jax.random.normal(key, shape, dtype=jnp.float32)
        self.shape = shape

    def __call__(self):
        return loan_amort_forward(self.tensor)


if __name__ == "__main__":
    key = jax.random.PRNGKey(0)
    k0, k1, k2, k3 = jax.random.split(key, 4)

    # 1) Module default (3,3,3): takes the small-input fast path.
    module = LoanAmortPallas(shape=(3, 3, 3), key=k0)
    out_small = jax.block_until_ready(module())
    assert out_small.shape == (3, 3, 3) and out_small.dtype == jnp.float32
    assert jnp.allclose(out_small, module.tensor + 1.0, atol=1e-6, rtol=1e-6)

    # 2) Same tiny tensor forced through the Pallas kernel (single full block).
    out_forced = jax.block_until_ready(
        loan_amort_forward(module.tensor, force_pallas=True))
    assert jnp.allclose(out_forced, module.tensor + 1.0, atol=1e-6, rtol=1e-6)

    # 3) 128-aligned f32 input: zero-copy (rows, 128) path, 2-block parallel grid.
    x_big = jax.random.normal(k1, (64, 33, 64), dtype=jnp.float32)  # 135168 elems
    out_big = jax.block_until_ready(loan_amort_forward(x_big))
    assert jnp.allclose(out_big, x_big + 1.0, atol=1e-6, rtol=1e-6)

    # 4) Non-128-aligned f32 input: minimal pad + masked partial last block.
    x_odd = jax.random.normal(k2, (70000,), dtype=jnp.float32)
    out_odd = jax.block_until_ready(loan_amort_forward(x_odd))
    assert jnp.allclose(out_odd, x_odd + 1.0, atol=1e-6, rtol=1e-6)

    # 5) bf16 input: checks the dtype-aware (16-sublane) block alignment.
    x_bf16 = jax.random.normal(k3, (256, 512), dtype=jnp.bfloat16)
    out_bf16 = jax.block_until_ready(loan_amort_forward(x_bf16))
    assert jnp.allclose(out_bf16, x_bf16 + 1.0)

    print("KERNEL_OK")
</pallas_src>

<mosaic_0001>
module attributes {stable_mosaic.version = 11 : i64} {
  func.func @_add_one_kernel(%arg0: i32, %arg1: memref<1x128xf32, #tpu.memory_space<vmem>>, %arg2: memref<1x128xf32, #tpu.memory_space<vmem>>) attributes {dimension_semantics = [#tpu.dimension_semantics<parallel>], iteration_bounds = array<i64: 1>, scalar_prefetch = 0 : i64, scratch_operands = 0 : i64, tpu.core_type = #tpu.core_type<tc>, window_params = [{transform_indices = @transform_0, window_bounds = array<i64: 1, 128>}, {transform_indices = @transform_1, window_bounds = array<i64: 1, 128>}]} {
    %c0 = arith.constant 0 : index
    %c0_0 = arith.constant 0 : index
    %0 = vector.load %arg1[%c0, %c0_0] : memref<1x128xf32, #tpu.memory_space<vmem>>, vector<1x128xf32>
    %cst = arith.constant 1.000000e+00 : f32
    %1 = vector.broadcast %cst : f32 to vector<1x128xf32>
    %2 = arith.addf %0, %1 : vector<1x128xf32>
    %c0_1 = arith.constant 0 : index
    %c0_2 = arith.constant 0 : index
    %3 = vector.load %arg2[%c0_1, %c0_2] : memref<1x128xf32, #tpu.memory_space<vmem>>, vector<1x128xf32>
    tpu.vector_store %arg2[%c0_1, %c0_2], %2 {strides = array<i32>} : memref<1x128xf32, #tpu.memory_space<vmem>>, vector<1x128xf32>,
    return
  }
  func.func @transform_0(%arg0: i32) -> (i32, i32) {
    %c0_i32 = arith.constant 0 : i32
    %c0_i32_0 = arith.constant 0 : i32
    return %arg0, %c0_i32 : i32, i32
  }
  func.func @transform_1(%arg0: i32) -> (i32, i32) {
    %c0_i32 = arith.constant 0 : i32
    %c0_i32_0 = arith.constant 0 : i32
    return %arg0, %c0_i32 : i32, i32
  }
}

</mosaic_0001>

<llo_original>
// kernel: tpu_custom_call.1
$region0: #{tpu_custom_call.1}
  #allocation0 [shape = 'u32[]', space=smem, size = 0x4, offset = 0x4, fixed_abs, tag = 'smem constant byte address 0x4 - core index']
  #allocation1 [shape = 'u32[72,128]{1,0:T(1,128)}', space=vmem, size = 0x9000, scoped, tag = 'internal scratch']
  %s0 = inlined_call_operand.hbm [shape: f32[1,128], index: 0, kind: input, shape index: {}]
  %s1 = inlined_call_operand.hbm [shape: f32[1,128], index: 1, kind: output, shape index: {}]
  %s2 = sld [smem:[#allocation0]]
  $region18: #{tpu_custom_call.1} parent=0
    _
  %s4 = ssub.s32 1, %s2
  %s5 = scalar_select 0, %s4, %s2
  $region1: #{tpu_custom_call.1} parent=0
    #allocation2 [shape = 'u8[512]{0}', space=vmem, size = 0x400, scoped, tag = 'input window, operand 0, single buffered']
    #allocation3 [shape = 's32[1]{0}', space=sflag, size = 0x4, scoped, tag = 'scoped memory for tpu_custom_call.1']
    #allocation4 [shape = 's32[1]{0}', space=sflag, size = 0x4, scoped, tag = 'scoped memory for tpu_custom_call.1']
    #allocation5 [shape = 'u8[512]{0}', space=vmem, size = 0x400, scoped, tag = 'output window, operand 0, single buffered']
    %6 = vsyncpa [#allocation3], 0
    %7 = vsyncpa [#allocation4], 0
    // Predicated region
    $region2: #{tpu_custom_call.1} parent=1 // pred_check
      _
    $region3: #{tpu_custom_call.1} parent=1 // pred_check_branch
      %9 = sbr.rel (0) target = $region5
    $region4: #{tpu_custom_call.1} parent=1 // pred_region
      %11 = vsyncadd [#allocation3], 0
      %s13 = sshll.u32 %s0, 4
      %s14 = int_to_ptr.hbm [resolvable:$true] %s13
      %s15 = sshll.u32 [#allocation2], 4
      %s16 = int_to_ptr.vmem [resolvable:$true] %s15
      %18 = dma.hbm_to_vmem [thread:$0]  %s14, 16, %s16, [#allocation3]
    $region5: #{tpu_custom_call.1} parent=1 // pred_fallthru
      _
    // Predicated region
    $region6: #{tpu_custom_call.1} parent=1 // pred_check
      _
    $region7: #{tpu_custom_call.1} parent=1 // pred_check_branch
      %20 = sbr.rel (0) target = $region9
    $region8: #{tpu_custom_call.1} parent=1 // pred_region
      %22 = dma.done [#allocation3], 16
    $region9: #{tpu_custom_call.1} parent=1 // pred_fallthru
      _
    %v23 = vld [vmem:[#allocation2] sm:$0x1]
    %v24 = vadd.f32 %v23, 1.0
    %25 = vst [vmem:[#allocation5] sm:$0x1] %v24
    // Predicated region
    $region10: #{tpu_custom_call.1} parent=1 // pred_check
      _
    $region11: #{tpu_custom_call.1} parent=1 // pred_check_branch
      %27 = sbr.rel (0) target = $region13
    $region12: #{tpu_custom_call.1} parent=1 // pred_region
      %29 = vsyncadd [#allocation4], 0
      %s31 = sshll.u32 [#allocation5], 4
      %s32 = int_to_ptr.vmem [resolvable:$true] %s31
      %s33 = sshll.u32 %s1, 4
      %s34 = int_to_ptr.hbm [resolvable:$true] %s33
      %36 = dma.vmem_to_hbm [thread:$0]  %s32, 16, %s34, [#allocation4]
    $region13: #{tpu_custom_call.1} parent=1 // pred_fallthru
      _
    // Predicated region
    $region14: #{tpu_custom_call.1} parent=1 // pred_check
      _
    $region15: #{tpu_custom_call.1} parent=1 // pred_check_branch
      %38 = sbr.rel (0) target = $region17
    $region16: #{tpu_custom_call.1} parent=1 // pred_region
      %40 = dma.done [#allocation4], 16
    $region17: #{tpu_custom_call.1} parent=1 // pred_fallthru
      _
    %41 = vsyncpa [#allocation3], 1
    %42 = vsyncpa [#allocation4], 1

</llo_original>
